<compile_context>
chip_gen: v6e
topology: v6e:2x2x1
jax: 0.10.0
libtpu: 0.0.40
codegen_flags: <defaults>
</compile_context>

<pallas_src>
import functools

import jax
import jax.numpy as jnp
from jax.experimental import pallas as pl
from jax.experimental.pallas import tpu as pltpu

INPUT_LENGTH = 250
N_PREDICTIONS = 10
HIDDEN = (256, 128, 64)

N_PAD = 128          # padded output lanes (lane-dense unmasked stores); sliced in wrapper
DEFAULT_TB = 1024    # batch-tile upper bound (multiple of 8; amortizes per-step overhead)


def _round_up(n, m):
    return ((n + m - 1) // m) * m


def mlp_kernel(x_ref,
               w1_ref, b1_ref, w2_ref, b2_ref, w3_ref, b3_ref, w4_ref, b4_ref,
               out_ref):
    # One batch tile per grid step; all four matmuls + bias + ReLU fused.
    # f32 -> bf16 cast of the streamed input is done here (free VPU work under DMA/MXU);
    # bf16 MXU inputs, f32 accumulation, bf16 re-cast between layers and on the final store.
    x = x_ref[...].astype(jnp.bfloat16)                                # (TB, 250)
    h = jnp.dot(x, w1_ref[...], preferred_element_type=jnp.float32) + b1_ref[...]
    h = jnp.maximum(h, 0.0).astype(jnp.bfloat16)
    h = jnp.dot(h, w2_ref[...], preferred_element_type=jnp.float32) + b2_ref[...]
    h = jnp.maximum(h, 0.0).astype(jnp.bfloat16)
    h = jnp.dot(h, w3_ref[...], preferred_element_type=jnp.float32) + b3_ref[...]
    h = jnp.maximum(h, 0.0).astype(jnp.bfloat16)
    out = jnp.dot(h, w4_ref[...], preferred_element_type=jnp.float32) + b4_ref[...]
    out_ref[...] = out.astype(jnp.bfloat16)                            # (TB, 128) bf16


def init_params(key, input_length=INPUT_LENGTH, n_predictions=N_PREDICTIONS):
    """Deterministic init mimicking nn.Linear's U(-1/sqrt(fan_in), 1/sqrt(fan_in)).

    Stored as (in, out) f32 (transpose of PyTorch's (out, in) layout) with (1, out) biases.
    """
    dims = [input_length, *HIDDEN, n_predictions]
    params = []
    for i in range(4):
        fan_in, fan_out = dims[i], dims[i + 1]
        key, kw, kb = jax.random.split(key, 3)
        bound = 1.0 / jnp.sqrt(float(fan_in))
        w = jax.random.uniform(kw, (fan_in, fan_out), jnp.float32, -bound, bound)
        b = jax.random.uniform(kb, (1, fan_out), jnp.float32, -bound, bound)
        params.append((w, b))
    return params


def pack_params(params):
    """One-time packing: cast weights to bf16; pad only the last layer N (10 -> 128).

    w1 keeps K=250 (the input is no longer padded in the wrapper). Biases stay f32
    (added to the f32 accumulator in-kernel).
    """
    (w1, b1), (w2, b2), (w3, b3), (w4, b4) = params
    w4p = jnp.pad(w4, ((0, 0), (0, N_PAD - w4.shape[1]))).astype(jnp.bfloat16)   # (64, 128)
    b4p = jnp.pad(b4, ((0, 0), (0, N_PAD - b4.shape[1])))                        # (1, 128) f32
    return (w1.astype(jnp.bfloat16), b1,
            w2.astype(jnp.bfloat16), b2,
            w3.astype(jnp.bfloat16), b3,
            w4p, b4p)


@functools.partial(jax.jit, static_argnames=("tb_max",))
def torch_nn_forward(x, packed, tb_max=DEFAULT_TB):
    """x: (batch, 1, input_length) or (batch, input_length). Returns (batch, n_predictions) f32."""
    # PyTorch `.squeeze()`: drop all size-1 dims (glue, done in plain JAX; reshape only).
    x = jnp.squeeze(x)
    if x.ndim == 1:
        x = x[None, :]
    batch, feat = x.shape

    # Batch tile: multiple of 8 sublanes. No wrapper-side batch padding / x copy — the grid
    # uses cdiv and the (possibly) partial trailing block is clipped on writeback.
    tb = min(tb_max, _round_up(batch, 8))
    if batch >= 512:
        # Expose >=2 grid steps so the "parallel" batch axis can split across v7x's 2 TCs.
        tb = min(tb, _round_up(pl.cdiv(batch, 2), 256))
    grid = (pl.cdiv(batch, tb),)

    w1p, b1, w2p, b2, w3p, b3, w4p, b4p = packed

    resident = lambda arr: pl.BlockSpec(arr.shape, lambda i: (0, 0))   # weights stay in VMEM
    in_specs = [
        pl.BlockSpec((tb, INPUT_LENGTH), lambda i: (i, 0)),            # x tile streams over batch
        resident(w1p), resident(b1),
        resident(w2p), resident(b2),
        resident(w3p), resident(b3),
        resident(w4p), resident(b4p),
    ]
    out_spec = pl.BlockSpec((tb, N_PAD), lambda i: (i, 0))

    out = pl.pallas_call(
        mlp_kernel,
        out_shape=jax.ShapeDtypeStruct((batch, N_PAD), jnp.bfloat16),
        grid=grid,
        in_specs=in_specs,
        out_specs=out_spec,
        compiler_params=pltpu.CompilerParams(
            dimension_semantics=("parallel",),
        ),
    )(x, w1p, b1, w2p, b2, w3p, b3, w4p, b4p)

    return out[:, :N_PREDICTIONS].astype(jnp.float32)


def reference_forward(x, params):
    """Pure-JAX reference using the same precision path (bf16 inputs, f32 accumulation)."""
    x = jnp.squeeze(x)
    if x.ndim == 1:
        x = x[None, :]
    h = x.astype(jnp.bfloat16)
    for layer, (w, b) in enumerate(params):
        h = jnp.dot(h, w.astype(jnp.bfloat16), preferred_element_type=jnp.float32) + b
        if layer < 3:
            h = jnp.maximum(h, 0.0).astype(jnp.bfloat16)
    return h


if __name__ == "__main__":
    key = jax.random.PRNGKey(0)
    kp, kx = jax.random.split(key)
    params = init_params(kp)
    packed = pack_params(params)

    batch = 8
    # Matches a typical (batch, 1, input_length) sequence tensor that .squeeze() flattens.
    x = jax.random.normal(kx, (batch, 1, INPUT_LENGTH), jnp.float32)

    out = torch_nn_forward(x, packed)
    out = jax.block_until_ready(out)

    ref = reference_forward(x, params)
    assert out.shape == (batch, N_PREDICTIONS)
    # Kernel output is stored as bf16 (~2^-9 rel error) while the reference keeps f32 output.
    assert jnp.allclose(out, ref, atol=2e-2, rtol=2e-2), (
        f"max abs err {jnp.max(jnp.abs(out - ref))}")
    print("KERNEL_OK")
</pallas_src>

<mosaic_0001>
module attributes {stable_mosaic.version = 11 : i64} {
  func.func @mlp_kernel(%arg0: i32, %arg1: memref<8x250xf32, #tpu.memory_space<vmem>>, %arg2: memref<250x256xbf16, #tpu.memory_space<vmem>>, %arg3: memref<1x256xf32, #tpu.memory_space<vmem>>, %arg4: memref<256x128xbf16, #tpu.memory_space<vmem>>, %arg5: memref<1x128xf32, #tpu.memory_space<vmem>>, %arg6: memref<128x64xbf16, #tpu.memory_space<vmem>>, %arg7: memref<1x64xf32, #tpu.memory_space<vmem>>, %arg8: memref<64x128xbf16, #tpu.memory_space<vmem>>, %arg9: memref<1x128xf32, #tpu.memory_space<vmem>>, %arg10: memref<8x128xbf16, #tpu.memory_space<vmem>>) attributes {dimension_semantics = [#tpu.dimension_semantics<parallel>], iteration_bounds = array<i64: 1>, scalar_prefetch = 0 : i64, scratch_operands = 0 : i64, tpu.core_type = #tpu.core_type<tc>, window_params = [{transform_indices = @transform_0, window_bounds = array<i64: 8, 250>}, {pipeline_mode = #tpu.pipeline_mode<synchronous>, transform_indices = @transform_1, window_bounds = array<i64: 250, 256>}, {pipeline_mode = #tpu.pipeline_mode<synchronous>, transform_indices = @transform_2, window_bounds = array<i64: 1, 256>}, {pipeline_mode = #tpu.pipeline_mode<synchronous>, transform_indices = @transform_3, window_bounds = array<i64: 256, 128>}, {pipeline_mode = #tpu.pipeline_mode<synchronous>, transform_indices = @transform_4, window_bounds = array<i64: 1, 128>}, {pipeline_mode = #tpu.pipeline_mode<synchronous>, transform_indices = @transform_5, window_bounds = array<i64: 128, 64>}, {pipeline_mode = #tpu.pipeline_mode<synchronous>, transform_indices = @transform_6, window_bounds = array<i64: 1, 64>}, {pipeline_mode = #tpu.pipeline_mode<synchronous>, transform_indices = @transform_7, window_bounds = array<i64: 64, 128>}, {pipeline_mode = #tpu.pipeline_mode<synchronous>, transform_indices = @transform_8, window_bounds = array<i64: 1, 128>}, {transform_indices = @transform_9, window_bounds = array<i64: 8, 128>}]} {
    %c0 = arith.constant 0 : index
    %c0_0 = arith.constant 0 : index
    %0 = vector.load %arg1[%c0, %c0_0] : memref<8x250xf32, #tpu.memory_space<vmem>>, vector<8x250xf32>
    %1 = arith.truncf %0 : vector<8x250xf32> to vector<8x250xbf16>
    %c0_1 = arith.constant 0 : index
    %c0_2 = arith.constant 0 : index
    %2 = vector.load %arg2[%c0_1, %c0_2] : memref<250x256xbf16, #tpu.memory_space<vmem>>, vector<250x256xbf16>
    %cst = arith.constant dense<0.000000e+00> : vector<8x256xf32>
    %3 = tpu.matmul %1, %2, %cst {dimension_numbers = #tpu.dot_dimension_numbers<[1], [0], [0], [1], [0, 0, 1, 1], [], []>} : vector<8x250xbf16>, vector<250x256xbf16>, vector<8x256xf32> -> vector<8x256xf32>
    %c0_3 = arith.constant 0 : index
    %c0_4 = arith.constant 0 : index
    %4 = vector.load %arg3[%c0_3, %c0_4] : memref<1x256xf32, #tpu.memory_space<vmem>>, vector<1x256xf32>
    %5 = vector.broadcast %4 : vector<1x256xf32> to vector<8x256xf32>
    %6 = arith.addf %3, %5 : vector<8x256xf32>
    %cst_5 = arith.constant 0.000000e+00 : f32
    %7 = vector.broadcast %cst_5 : f32 to vector<8x256xf32>
    %8 = arith.maximumf %6, %7 : vector<8x256xf32>
    %9 = arith.truncf %8 : vector<8x256xf32> to vector<8x256xbf16>
    %c0_6 = arith.constant 0 : index
    %c0_7 = arith.constant 0 : index
    %10 = vector.load %arg4[%c0_6, %c0_7] : memref<256x128xbf16, #tpu.memory_space<vmem>>, vector<256x128xbf16>
    %cst_8 = arith.constant dense<0.000000e+00> : vector<8x128xf32>
    %11 = tpu.matmul %9, %10, %cst_8 {dimension_numbers = #tpu.dot_dimension_numbers<[1], [0], [0], [1], [0, 0, 1, 1], [], []>} : vector<8x256xbf16>, vector<256x128xbf16>, vector<8x128xf32> -> vector<8x128xf32>
    %c0_9 = arith.constant 0 : index
    %c0_10 = arith.constant 0 : index
    %12 = vector.load %arg5[%c0_9, %c0_10] : memref<1x128xf32, #tpu.memory_space<vmem>>, vector<1x128xf32>
    %13 = vector.broadcast %12 : vector<1x128xf32> to vector<8x128xf32>
    %14 = arith.addf %11, %13 : vector<8x128xf32>
    %cst_11 = arith.constant 0.000000e+00 : f32
    %15 = vector.broadcast %cst_11 : f32 to vector<8x128xf32>
    %16 = arith.maximumf %14, %15 : vector<8x128xf32>
    %17 = arith.truncf %16 : vector<8x128xf32> to vector<8x128xbf16>
    %c0_12 = arith.constant 0 : index
    %c0_13 = arith.constant 0 : index
    %18 = vector.load %arg6[%c0_12, %c0_13] : memref<128x64xbf16, #tpu.memory_space<vmem>>, vector<128x64xbf16>
    %cst_14 = arith.constant dense<0.000000e+00> : vector<8x64xf32>
    %19 = tpu.matmul %17, %18, %cst_14 {dimension_numbers = #tpu.dot_dimension_numbers<[1], [0], [0], [1], [0, 0, 1, 1], [], []>} : vector<8x128xbf16>, vector<128x64xbf16>, vector<8x64xf32> -> vector<8x64xf32>
    %c0_15 = arith.constant 0 : index
    %c0_16 = arith.constant 0 : index
    %20 = vector.load %arg7[%c0_15, %c0_16] : memref<1x64xf32, #tpu.memory_space<vmem>>, vector<1x64xf32>
    %21 = vector.broadcast %20 : vector<1x64xf32> to vector<8x64xf32>
    %22 = arith.addf %19, %21 : vector<8x64xf32>
    %cst_17 = arith.constant 0.000000e+00 : f32
    %23 = vector.broadcast %cst_17 : f32 to vector<8x64xf32>
    %24 = arith.maximumf %22, %23 : vector<8x64xf32>
    %25 = arith.truncf %24 : vector<8x64xf32> to vector<8x64xbf16>
    %c0_18 = arith.constant 0 : index
    %c0_19 = arith.constant 0 : index
    %26 = vector.load %arg8[%c0_18, %c0_19] : memref<64x128xbf16, #tpu.memory_space<vmem>>, vector<64x128xbf16>
    %cst_20 = arith.constant dense<0.000000e+00> : vector<8x128xf32>
    %27 = tpu.matmul %25, %26, %cst_20 {dimension_numbers = #tpu.dot_dimension_numbers<[1], [0], [0], [1], [0, 0, 1, 1], [], []>} : vector<8x64xbf16>, vector<64x128xbf16>, vector<8x128xf32> -> vector<8x128xf32>
    %c0_21 = arith.constant 0 : index
    %c0_22 = arith.constant 0 : index
    %28 = vector.load %arg9[%c0_21, %c0_22] : memref<1x128xf32, #tpu.memory_space<vmem>>, vector<1x128xf32>
    %29 = vector.broadcast %28 : vector<1x128xf32> to vector<8x128xf32>
    %30 = arith.addf %27, %29 : vector<8x128xf32>
    %31 = arith.truncf %30 : vector<8x128xf32> to vector<8x128xbf16>
    %c0_23 = arith.constant 0 : index
    %c0_24 = arith.constant 0 : index
    %32 = vector.load %arg10[%c0_23, %c0_24] : memref<8x128xbf16, #tpu.memory_space<vmem>>, vector<8x128xbf16>
    tpu.vector_store %arg10[%c0_23, %c0_24], %31 {strides = array<i32>} : memref<8x128xbf16, #tpu.memory_space<vmem>>, vector<8x128xbf16>,
    return
  }
  func.func @transform_0(%arg0: i32) -> (i32, i32) {
    %c0_i32 = arith.constant 0 : i32
    %c0_i32_0 = arith.constant 0 : i32
    return %arg0, %c0_i32 : i32, i32
  }
  func.func @transform_1(%arg0: i32) -> (i32, i32) {
    %c0_i32 = arith.constant 0 : i32
    %c0_i32_0 = arith.constant 0 : i32
    %c0_i32_1 = arith.constant 0 : i32
    return %c0_i32, %c0_i32_0 : i32, i32
  }
  func.func @transform_2(%arg0: i32) -> (i32, i32) {
    %c0_i32 = arith.constant 0 : i32
    %c0_i32_0 = arith.constant 0 : i32
    %c0_i32_1 = arith.constant 0 : i32
    return %c0_i32, %c0_i32_0 : i32, i32
  }
  func.func @transform_3(%arg0: i32) -> (i32, i32) {
    %c0_i32 = arith.constant 0 : i32
    %c0_i32_0 = arith.constant 0 : i32
    %c0_i32_1 = arith.constant 0 : i32
    return %c0_i32, %c0_i32_0 : i32, i32
  }
  func.func @transform_4(%arg0: i32) -> (i32, i32) {
    %c0_i32 = arith.constant 0 : i32
    %c0_i32_0 = arith.constant 0 : i32
    %c0_i32_1 = arith.constant 0 : i32
    return %c0_i32, %c0_i32_0 : i32, i32
  }
  func.func @transform_5(%arg0: i32) -> (i32, i32) {
    %c0_i32 = arith.constant 0 : i32
    %c0_i32_0 = arith.constant 0 : i32
    %c0_i32_1 = arith.constant 0 : i32
    return %c0_i32, %c0_i32_0 : i32, i32
  }
  func.func @transform_6(%arg0: i32) -> (i32, i32) {
    %c0_i32 = arith.constant 0 : i32
    %c0_i32_0 = arith.constant 0 : i32
    %c0_i32_1 = arith.constant 0 : i32
    return %c0_i32, %c0_i32_0 : i32, i32
  }
  func.func @transform_7(%arg0: i32) -> (i32, i32) {
    %c0_i32 = arith.constant 0 : i32
    %c0_i32_0 = arith.constant 0 : i32
    %c0_i32_1 = arith.constant 0 : i32
    return %c0_i32, %c0_i32_0 : i32, i32
  }
  func.func @transform_8(%arg0: i32) -> (i32, i32) {
    %c0_i32 = arith.constant 0 : i32
    %c0_i32_0 = arith.constant 0 : i32
    %c0_i32_1 = arith.constant 0 : i32
    return %c0_i32, %c0_i32_0 : i32, i32
  }
  func.func @transform_9(%arg0: i32) -> (i32, i32) {
    %c0_i32 = arith.constant 0 : i32
    %c0_i32_0 = arith.constant 0 : i32
    return %arg0, %c0_i32 : i32, i32
  }
}

</mosaic_0001>

<llo_original>
// kernel: torch_nn_forward.1
$region0: #{torch_nn_forward.1}
  #allocation0 [shape = 'u32[]', space=smem, size = 0x4, offset = 0x4, fixed_abs, tag = 'smem constant byte address 0x4 - core index']
  #allocation1 [shape = 'u32[144,128]{1,0:T(1,128)}', space=vmem, size = 0x12000, scoped, tag = 'internal scratch']
  %s0 = inlined_call_operand.vmem [shape: f32[8,250], index: 0, kind: input, shape index: {}]
  %s1 = inlined_call_operand.hbm [shape: bf16[250,256], index: 1, kind: input, shape index: {}]
  %s2 = inlined_call_operand.vmem [shape: f32[1,256], index: 2, kind: input, shape index: {}]
  %s3 = inlined_call_operand.vmem [shape: bf16[256,128], index: 3, kind: input, shape index: {}]
  %s4 = inlined_call_operand.vmem [shape: f32[1,128], index: 4, kind: input, shape index: {}]
  %s5 = inlined_call_operand.vmem [shape: bf16[128,64], index: 5, kind: input, shape index: {}]
  %s6 = inlined_call_operand.vmem [shape: f32[1,64], index: 6, kind: input, shape index: {}]
  %s7 = inlined_call_operand.hbm [shape: bf16[64,128], index: 7, kind: input, shape index: {}]
  %s8 = inlined_call_operand.vmem [shape: f32[1,128], index: 8, kind: input, shape index: {}]
  %s9 = inlined_call_operand.vmem [shape: bf16[8,128], index: 9, kind: output, shape index: {}]
  %s10 = sld [smem:[#allocation0]]
  $region54: #{torch_nn_forward.1} parent=0
    _
  %s12 = ssub.s32 1, %s10
  %s13 = scalar_select 0, %s12, %s10
  $region1: #{torch_nn_forward.1} parent=0
    #allocation2 [shape = 'u8[131072]{0}', space=vmem, size = 0x20000, scoped, tag = 'input window, operand 1, single buffered']
    #allocation3 [shape = 's32[1]{0}', space=sflag, size = 0x4, scoped, tag = 'scoped memory for torch_nn_forward.1']
    #allocation4 [shape = 'u8[16384]{0}', space=vmem, size = 0x4000, scoped, tag = 'input window, operand 7, single buffered']
    #allocation5 [shape = 's32[1]{0}', space=sflag, size = 0x4, scoped, tag = 'scoped memory for torch_nn_forward.1']
    %14 = vsyncpa [#allocation3], 0
    %15 = vsyncpa [#allocation5], 0
    // Predicated region
    $region2: #{torch_nn_forward.1} parent=1 // pred_check
      _
    $region3: #{torch_nn_forward.1} parent=1 // pred_check_branch
      %17 = sbr.rel (0) target = $region5
    $region4: #{torch_nn_forward.1} parent=1 // pred_region
      _
    $region5: #{torch_nn_forward.1} parent=1 // pred_fallthru
      _
    // Predicated region
    $region6: #{torch_nn_forward.1} parent=1 // pred_check
      _
    $region7: #{torch_nn_forward.1} parent=1 // pred_check_branch
      %19 = sbr.rel (0) target = $region9
    $region8: #{torch_nn_forward.1} parent=1 // pred_region
      %s21 = ssub.s32 4096, 4096
      %22 = vsyncadd [#allocation3], %s21
      %s23 = sshll.u32 [#allocation2], 4
      %s24 = int_to_ptr.vmem [resolvable:$true] %s23
      %29 = dma.hbm_to_vmem [thread:$0]  %s1, 4096, %s24, [#allocation3], 128, 128, 8
    $region9: #{torch_nn_forward.1} parent=1 // pred_fallthru
      _
    // Predicated region
    $region10: #{torch_nn_forward.1} parent=1 // pred_check
      _
    $region11: #{torch_nn_forward.1} parent=1 // pred_check_branch
      %31 = sbr.rel (0) target = $region13
    $region12: #{torch_nn_forward.1} parent=1 // pred_region
      _
    $region13: #{torch_nn_forward.1} parent=1 // pred_fallthru
      _
    // Predicated region
    $region14: #{torch_nn_forward.1} parent=1 // pred_check
      _
    $region15: #{torch_nn_forward.1} parent=1 // pred_check_branch
      %33 = sbr.rel (0) target = $region17
    $region16: #{torch_nn_forward.1} parent=1 // pred_region
      _
    $region17: #{torch_nn_forward.1} parent=1 // pred_fallthru
      _
    // Predicated region
    $region18: #{torch_nn_forward.1} parent=1 // pred_check
      _
    $region19: #{torch_nn_forward.1} parent=1 // pred_check_branch
      %35 = sbr.rel (0) target = $region21
    $region20: #{torch_nn_forward.1} parent=1 // pred_region
      _
    $region21: #{torch_nn_forward.1} parent=1 // pred_fallthru
      _
    // Predicated region
    $region22: #{torch_nn_forward.1} parent=1 // pred_check
      _
    $region23: #{torch_nn_forward.1} parent=1 // pred_check_branch
      %37 = sbr.rel (0) target = $region25
    $region24: #{torch_nn_forward.1} parent=1 // pred_region
      _
    $region25: #{torch_nn_forward.1} parent=1 // pred_fallthru
      _
    // Predicated region
    $region26: #{torch_nn_forward.1} parent=1 // pred_check
      _
    $region27: #{torch_nn_forward.1} parent=1 // pred_check_branch
      %39 = sbr.rel (0) target = $region29
    $region28: #{torch_nn_forward.1} parent=1 // pred_region
      _
    $region29: #{torch_nn_forward.1} parent=1 // pred_fallthru
      _
    // Predicated region
    $region30: #{torch_nn_forward.1} parent=1 // pred_check
      _
    $region31: #{torch_nn_forward.1} parent=1 // pred_check_branch
      %41 = sbr.rel (0) target = $region33
    $region32: #{torch_nn_forward.1} parent=1 // pred_region
      %s43 = ssub.s32 512, 512
      %44 = vsyncadd [#allocation5], %s43
      %s45 = sshll.u32 [#allocation4], 4
      %s46 = int_to_ptr.vmem [resolvable:$true] %s45
      %51 = dma.hbm_to_vmem [thread:$0]  %s7, 512, %s46, [#allocation5], 64, 64, 4
    $region33: #{torch_nn_forward.1} parent=1 // pred_fallthru
      _
    // Predicated region
    $region34: #{torch_nn_forward.1} parent=1 // pred_check
      _
    $region35: #{torch_nn_forward.1} parent=1 // pred_check_branch
      %53 = sbr.rel (0) target = $region37
    $region36: #{torch_nn_forward.1} parent=1 // pred_region
      _
    $region37: #{torch_nn_forward.1} parent=1 // pred_fallthru
      _
    // Predicated region
    $region38: #{torch_nn_forward.1} parent=1 // pred_check
      _
    $region39: #{torch_nn_forward.1} parent=1 // pred_check_branch
      %55 = sbr.rel (0) target = $region41
    $region40: #{torch_nn_forward.1} parent=1 // pred_region
      %56 = dma.done [#allocation3], 4096
    $region41: #{torch_nn_forward.1} parent=1 // pred_fallthru
      _
    // Predicated region
    $region42: #{torch_nn_forward.1} parent=1 // pred_check
      _
    $region43: #{torch_nn_forward.1} parent=1 // pred_check_branch
      %58 = sbr.rel (0) target = $region45
    $region44: #{torch_nn_forward.1} parent=1 // pred_region
      %59 = dma.done [#allocation5], 512
    $region45: #{torch_nn_forward.1} parent=1 // pred_fallthru
      _
    %v61 = vld [vmem:[%s0] sm:$0xff]
    %v62 = vld [vmem:[%s0 + $0x8] sm:$0xff]
    %v63 = vpack.c.bf16 %v61, %v61
    %v64 = vpack.c.bf16 %v62, %v62
    %v65 = vld [vmem:[#allocation2] sm:$0xff]
    %v66 = vld [vmem:[#allocation2 + $0x8] sm:$0xff]
    %v67 = vld [vmem:[#allocation2 + $0x10] sm:$0xff]
    %v68 = vld [vmem:[#allocation2 + $0x18] sm:$0xff]
    %v69 = vld [vmem:[#allocation2 + $0x20] sm:$0xff]
    %v70 = vld [vmem:[#allocation2 + $0x28] sm:$0xff]
    %v71 = vld [vmem:[#allocation2 + $0x30] sm:$0xff]
    %v72 = vld [vmem:[#allocation2 + $0x38] sm:$0xff]
    %v73 = vld [vmem:[#allocation2 + $0x40] sm:$0xff]
    %v74 = vld [vmem:[#allocation2 + $0x48] sm:$0xff]
    %v75 = vld [vmem:[#allocation2 + $0x50] sm:$0xff]
    %v76 = vld [vmem:[#allocation2 + $0x58] sm:$0xff]
    %v77 = vld [vmem:[#allocation2 + $0x60] sm:$0xff]
    %v78 = vld [vmem:[#allocation2 + $0x68] sm:$0xff]
    %v79 = vld [vmem:[#allocation2 + $0x70] sm:$0xff]
    %v80 = vld [vmem:[#allocation2 + $0x78] sm:$0xff]
    %v81 = vld [vmem:[#allocation2 + $0x80] sm:$0xff]
    %v82 = vld [vmem:[#allocation2 + $0x88] sm:$0xff]
    %v83 = vld [vmem:[#allocation2 + $0x90] sm:$0xff]
    %v84 = vld [vmem:[#allocation2 + $0x98] sm:$0xff]
    %v85 = vld [vmem:[#allocation2 + $0xa0] sm:$0xff]
    %v86 = vld [vmem:[#allocation2 + $0xa8] sm:$0xff]
    %v87 = vld [vmem:[#allocation2 + $0xb0] sm:$0xff]
    %v88 = vld [vmem:[#allocation2 + $0xb8] sm:$0xff]
    %v89 = vld [vmem:[#allocation2 + $0xc0] sm:$0xff]
    %v90 = vld [vmem:[#allocation2 + $0xc8] sm:$0xff]
    %v91 = vld [vmem:[#allocation2 + $0xd0] sm:$0xff]
    %v92 = vld [vmem:[#allocation2 + $0xd8] sm:$0xff]
    %v93 = vld [vmem:[#allocation2 + $0xe0] sm:$0xff]
    %v94 = vld [vmem:[#allocation2 + $0xe8] sm:$0xff]
    %v95 = vld [vmem:[#allocation2 + $0xf0] sm:$0xff]
    %v96 = vld [vmem:[#allocation2 + $0xf8] sm:$0x11]
    %v97 = vld [vmem:[%s2] sm:$0x3]
    %v99 = vlaneseq
    %v100 = vshrl.u32 %v99, 7
    %v101 = vsub.s32 0, %v100
    %v102 = vrot.slane %v97, %v101
    %v103 = vlaneseq
    %v104 = vshrl.u32 %v103, 7
    %v105 = vsub.s32 1, %v104
    %v106 = vrot.slane %v97, %v105
    %v141 = vunpack.c.l.b16 %v65
    %v142 = vunpack.c.h.b16 %v65
    %v143 = vunpack.c.l.b16 %v66
    %v144 = vunpack.c.h.b16 %v66
    %v145 = vunpack.c.l.b16 %v67
    %v146 = vunpack.c.h.b16 %v67
    %v147 = vunpack.c.l.b16 %v68
    %v148 = vunpack.c.h.b16 %v68
    %v149 = vunpack.c.l.b16 %v69
    %v150 = vunpack.c.h.b16 %v69
    %v151 = vunpack.c.l.b16 %v70
    %v152 = vunpack.c.h.b16 %v70
    %v153 = vunpack.c.l.b16 %v71
    %v154 = vunpack.c.h.b16 %v71
    %v155 = vunpack.c.l.b16 %v72
    %v156 = vunpack.c.h.b16 %v72
    %v157 = vunpack.c.l.b16 %v73
    %v158 = vunpack.c.h.b16 %v73
    %v159 = vunpack.c.l.b16 %v74
    %v160 = vunpack.c.h.b16 %v74
    %v161 = vunpack.c.l.b16 %v75
    %v162 = vunpack.c.h.b16 %v75
    %v163 = vunpack.c.l.b16 %v76
    %v164 = vunpack.c.h.b16 %v76
    %v165 = vunpack.c.l.b16 %v77
    %v166 = vunpack.c.h.b16 %v77
    %v167 = vunpack.c.l.b16 %v78
    %v168 = vunpack.c.h.b16 %v78
    %v169 = vunpack.c.l.b16 %v79
    %v170 = vunpack.c.h.b16 %v79
    %v171 = vunpack.c.l.b16 %v80
    %v172 = vunpack.c.h.b16 %v80
    %v173 = vunpack.c.l.b16 %v81
    %v174 = vunpack.c.h.b16 %v81
    %v175 = vunpack.c.l.b16 %v82
    %v176 = vunpack.c.h.b16 %v82
    %v177 = vunpack.c.l.b16 %v83
    %v178 = vunpack.c.h.b16 %v83
    %v179 = vunpack.c.l.b16 %v84
    %v180 = vunpack.c.h.b16 %v84
    %v181 = vunpack.c.l.b16 %v85
    %v182 = vunpack.c.h.b16 %v85
    %v183 = vunpack.c.l.b16 %v86
    %v184 = vunpack.c.h.b16 %v86
    %v185 = vunpack.c.l.b16 %v87
    %v186 = vunpack.c.h.b16 %v87
    %v187 = vunpack.c.l.b16 %v88
    %v188 = vunpack.c.h.b16 %v88
    %v189 = vunpack.c.l.b16 %v89
    %v190 = vunpack.c.h.b16 %v89
    %v191 = vunpack.c.l.b16 %v90
    %v192 = vunpack.c.h.b16 %v90
    %v193 = vunpack.c.l.b16 %v91
    %v194 = vunpack.c.h.b16 %v91
    %v195 = vunpack.c.l.b16 %v92
    %v196 = vunpack.c.h.b16 %v92
    %v197 = vunpack.c.l.b16 %v93
    %v198 = vunpack.c.h.b16 %v93
    %v199 = vunpack.c.l.b16 %v94
    %v200 = vunpack.c.h.b16 %v94
    %v201 = vunpack.c.l.b16 %v95
    %v202 = vunpack.c.h.b16 %v95
    %v203 = vunpack.c.l.b16 %v96
    %v204 = vunpack.c.h.b16 %v96
    %v205 = vpack.c.b16 %v143, %v141
    %v206 = vpack.c.b16 %v144, %v142
    %v207 = vpack.c.b16 %v147, %v145
    %v208 = vpack.c.b16 %v148, %v146
    %v209 = vpack.c.b16 %v151, %v149
    %v210 = vpack.c.b16 %v152, %v150
    %v211 = vpack.c.b16 %v155, %v153
    %v212 = vpack.c.b16 %v156, %v154
    %v213 = vpack.c.b16 %v159, %v157
    %v214 = vpack.c.b16 %v160, %v158
    %v215 = vpack.c.b16 %v163, %v161
    %v216 = vpack.c.b16 %v164, %v162
    %v217 = vpack.c.b16 %v167, %v165
    %v218 = vpack.c.b16 %v168, %v166
    %v219 = vpack.c.b16 %v171, %v169
    %v220 = vpack.c.b16 %v172, %v170
    %v221 = vpack.c.b16 %v175, %v173
    %v222 = vpack.c.b16 %v176, %v174
    %v223 = vpack.c.b16 %v179, %v177
    %v224 = vpack.c.b16 %v180, %v178
    %v225 = vpack.c.b16 %v183, %v181
    %v226 = vpack.c.b16 %v184, %v182
    %v227 = vpack.c.b16 %v187, %v185
    %v228 = vpack.c.b16 %v188, %v186
    %v229 = vpack.c.b16 %v191, %v189
    %v230 = vpack.c.b16 %v192, %v190
    %v231 = vpack.c.b16 %v195, %v193
    %v232 = vpack.c.b16 %v196, %v194
    %v233 = vpack.c.b16 %v199, %v197
    %v234 = vpack.c.b16 %v200, %v198
    %v235 = vpack.c.b16 %v203, %v201
    %v236 = vpack.c.b16 %v204, %v202
    %vm267 = vcmask 998400
    %v269 = vsel %vm267, %v64, 0
    %vm271 = vcmask 1044480
    %v273 = vsel %vm271, %v235, 0
    %v276 = vsel %vm271, %v236, 0
    %278 = vmatprep.subr.bf16.mxu0 %v220
    %279 = vmatpush1.bf16.msra.mxu0 %v219
    %280 = vmatprep.subr.bf16.mxu0 %v218
    %281 = vmatpush1.bf16.msra.mxu0 %v217
    %282 = vmatprep.subr.bf16.mxu0 %v216
    %283 = vmatpush1.bf16.msra.mxu0 %v215
    %284 = vmatprep.subr.bf16.mxu0 %v214
    %285 = vmatpush1.bf16.msra.mxu0 %v213
    %286 = vmatprep.subr.bf16.mxu0 %v212
    %287 = vmatpush1.bf16.msra.mxu0 %v211
    %288 = vmatprep.subr.bf16.mxu0 %v210
    %289 = vmatpush1.bf16.msra.mxu0 %v209
    %290 = vmatprep.subr.bf16.mxu0 %v208
    %291 = vmatpush1.bf16.msra.mxu0 %v207
    %292 = vmatprep.subr.bf16.mxu0 %v206
    %293 = vmatpush1.bf16.msra.mxu0 %v205
    %294 = vmatprep.subr.bf16.mxu0 %v276
    %295 = vmatpush2.bf16.msra.mxu0 %v273
    %296 = vmatprep.subr.bf16.mxu0 %v234
    %297 = vmatpush2.bf16.msra.mxu0 %v233
    %298 = vmatprep.subr.bf16.mxu0 %v232
    %299 = vmatpush2.bf16.msra.mxu0 %v231
    %300 = vmatprep.subr.bf16.mxu0 %v230
    %301 = vmatpush2.bf16.msra.mxu0 %v229
    %302 = vmatprep.subr.bf16.mxu0 %v228
    %303 = vmatpush2.bf16.msra.mxu0 %v227
    %304 = vmatprep.subr.bf16.mxu0 %v226
    %305 = vmatpush2.bf16.msra.mxu0 %v225
    %306 = vmatprep.subr.bf16.mxu0 %v224
    %307 = vmatpush2.bf16.msra.mxu0 %v223
    %308 = vmatprep.subr.bf16.mxu0 %v222
    %309 = vmatpush2.bf16.msra.mxu0 %v221
    %310 = vmatprep.mubr.bf16.mxu0 %v269
    %311 = vmatmul.mubr.bf16.gmra.mxu0 %v63
    %v312 = vpop.f32.mrf.mxu0
    %v313 = vadd.f32 %v102, %v312
    %v314 = vpop.f32.mrf.mxu0
    %v315 = vadd.f32 %v106, %v314
    %v316 = vpop.f32.mrf.mxu0
    %v317 = vpop.f32.mrf.mxu0
    %318 = vdwg.mxu0
    %v319 = vmax.f32 %v313, 0.0
    %v320 = vmax.f32 %v315, 0.0
    %v321 = vpack.c.bf16 %v319, %v319
    %v322 = vpack.c.bf16 %v320, %v320
    %v323 = vld [vmem:[%s3] sm:$0xf]
    %v324 = vld [vmem:[%s3 + $0x4] sm:$0xf]
    %v325 = vld [vmem:[%s3 + $0x8] sm:$0xf]
    %v326 = vld [vmem:[%s3 + $0xc] sm:$0xf]
    %v327 = vld [vmem:[%s3 + $0x10] sm:$0xf]
    %v328 = vld [vmem:[%s3 + $0x14] sm:$0xf]
    %v329 = vld [vmem:[%s3 + $0x18] sm:$0xf]
    %v330 = vld [vmem:[%s3 + $0x1c] sm:$0xf]
    %v331 = vld [vmem:[%s3 + $0x20] sm:$0xf]
    %v332 = vld [vmem:[%s3 + $0x24] sm:$0xf]
    %v333 = vld [vmem:[%s3 + $0x28] sm:$0xf]
    %v334 = vld [vmem:[%s3 + $0x2c] sm:$0xf]
    %v335 = vld [vmem:[%s3 + $0x30] sm:$0xf]
    %v336 = vld [vmem:[%s3 + $0x34] sm:$0xf]
    %v337 = vld [vmem:[%s3 + $0x38] sm:$0xf]
    %v338 = vld [vmem:[%s3 + $0x3c] sm:$0xf]
    %v339 = vld [vmem:[%s3 + $0x40] sm:$0xf]
    %v340 = vld [vmem:[%s3 + $0x44] sm:$0xf]
    %v341 = vld [vmem:[%s3 + $0x48] sm:$0xf]
    %v342 = vld [vmem:[%s3 + $0x4c] sm:$0xf]
    %v343 = vld [vmem:[%s3 + $0x50] sm:$0xf]
    %v344 = vld [vmem:[%s3 + $0x54] sm:$0xf]
    %v345 = vld [vmem:[%s3 + $0x58] sm:$0xf]
    %v346 = vld [vmem:[%s3 + $0x5c] sm:$0xf]
    %v347 = vld [vmem:[%s3 + $0x60] sm:$0xf]
    %v348 = vld [vmem:[%s3 + $0x64] sm:$0xf]
    %v349 = vld [vmem:[%s3 + $0x68] sm:$0xf]
    %v350 = vld [vmem:[%s3 + $0x6c] sm:$0xf]
    %v351 = vld [vmem:[%s3 + $0x70] sm:$0xf]
    %v352 = vld [vmem:[%s3 + $0x74] sm:$0xf]
    %v353 = vld [vmem:[%s3 + $0x78] sm:$0xf]
    %v354 = vld [vmem:[%s3 + $0x7c] sm:$0xf]
    %v355 = vld [vmem:[%s4] sm:$0x1]
    %v357 = vlaneseq
    %v358 = vshrl.u32 %v357, 7
    %v359 = vsub.s32 0, %v358
    %v360 = vrot.slane %v355, %v359
    %v394 = vunpack.c.l.b16 %v323
    %v395 = vunpack.c.l.b16 %v324
    %v396 = vunpack.c.l.b16 %v325
    %v397 = vunpack.c.l.b16 %v326
    %v398 = vunpack.c.l.b16 %v327
    %v399 = vunpack.c.l.b16 %v328
    %v400 = vunpack.c.l.b16 %v329
    %v401 = vunpack.c.l.b16 %v330
    %v402 = vunpack.c.l.b16 %v331
    %v403 = vunpack.c.l.b16 %v332
    %v404 = vunpack.c.l.b16 %v333
    %v405 = vunpack.c.l.b16 %v334
    %v406 = vunpack.c.l.b16 %v335
    %v407 = vunpack.c.l.b16 %v336
    %v408 = vunpack.c.l.b16 %v337
    %v409 = vunpack.c.l.b16 %v338
    %v410 = vunpack.c.l.b16 %v339
    %v411 = vunpack.c.l.b16 %v340
    %v412 = vunpack.c.l.b16 %v341
    %v413 = vunpack.c.l.b16 %v342
    %v414 = vunpack.c.l.b16 %v343
    %v415 = vunpack.c.l.b16 %v344
    %v416 = vunpack.c.l.b16 %v345
    %v417 = vunpack.c.l.b16 %v346
    %v418 = vunpack.c.l.b16 %v347
    %v419 = vunpack.c.l.b16 %v348
    %v420 = vunpack.c.l.b16 %v349
    %v421 = vunpack.c.l.b16 %v350
    %v422 = vunpack.c.l.b16 %v351
    %v423 = vunpack.c.l.b16 %v352
    %v424 = vunpack.c.l.b16 %v353
    %v425 = vunpack.c.l.b16 %v354
    %v426 = vpack.c.b16 %v395, %v394
    %v427 = vpack.c.b16 %v397, %v396
    %v428 = vpack.c.b16 %v399, %v398
    %v429 = vpack.c.b16 %v401, %v400
    %v430 = vpack.c.b16 %v403, %v402
    %v431 = vpack.c.b16 %v405, %v404
    %v432 = vpack.c.b16 %v407, %v406
    %v433 = vpack.c.b16 %v409, %v408
    %v434 = vpack.c.b16 %v411, %v410
    %v435 = vpack.c.b16 %v413, %v412
    %v436 = vpack.c.b16 %v415, %v414
    %v437 = vpack.c.b16 %v417, %v416
    %v438 = vpack.c.b16 %v419, %v418
    %v439 = vpack.c.b16 %v421, %v420
    %v440 = vpack.c.b16 %v423, %v422
    %v441 = vpack.c.b16 %v425, %v424
    %458 = vmatprep.subr.bf16.mxu0 0
    %459 = vmatpush1.bf16.msra.mxu0 %v433
    %460 = vmatprep.subr.bf16.mxu0 0
    %461 = vmatpush1.bf16.msra.mxu0 %v432
    %462 = vmatprep.subr.bf16.mxu0 0
    %463 = vmatpush1.bf16.msra.mxu0 %v431
    %464 = vmatprep.subr.bf16.mxu0 0
    %465 = vmatpush1.bf16.msra.mxu0 %v430
    %466 = vmatprep.subr.bf16.mxu0 0
    %467 = vmatpush1.bf16.msra.mxu0 %v429
    %468 = vmatprep.subr.bf16.mxu0 0
    %469 = vmatpush1.bf16.msra.mxu0 %v428
    %470 = vmatprep.subr.bf16.mxu0 0
    %471 = vmatpush1.bf16.msra.mxu0 %v427
    %472 = vmatprep.subr.bf16.mxu0 0
    %473 = vmatpush1.bf16.msra.mxu0 %v426
    %474 = vmatprep.subr.bf16.mxu0 0
    %475 = vmatpush2.bf16.msra.mxu0 %v441
    %476 = vmatprep.subr.bf16.mxu0 0
    %477 = vmatpush2.bf16.msra.mxu0 %v440
    %478 = vmatprep.subr.bf16.mxu0 0
    %479 = vmatpush2.bf16.msra.mxu0 %v439
    %480 = vmatprep.subr.bf16.mxu0 0
    %481 = vmatpush2.bf16.msra.mxu0 %v438
    %482 = vmatprep.subr.bf16.mxu0 0
    %483 = vmatpush2.bf16.msra.mxu0 %v437
    %484 = vmatprep.subr.bf16.mxu0 0
    %485 = vmatpush2.bf16.msra.mxu0 %v436
    %486 = vmatprep.subr.bf16.mxu0 0
    %487 = vmatpush2.bf16.msra.mxu0 %v435
    %488 = vmatprep.subr.bf16.mxu0 0
    %489 = vmatpush2.bf16.msra.mxu0 %v434
    %490 = vmatprep.mubr.bf16.mxu0 %v322
    %491 = vmatmul.mubr.bf16.gmra.mxu0 %v321
    %v492 = vpop.f32.mrf.mxu0
    %v493 = vadd.f32 %v360, %v492
    %v494 = vpop.f32.mrf.mxu0
    %v495 = vpop.f32.mrf.mxu0
    %v496 = vpop.f32.mrf.mxu0
    %497 = vdwg.mxu0
    %v498 = vmax.f32 %v493, 0.0
    %v499 = vpack.c.bf16 %v498, %v498
    %v500 = vld [vmem:[%s5] sm:$0xf]
    %v501 = vld [vmem:[%s5 + $0x4] sm:$0xf]
    %v502 = vld [vmem:[%s5 + $0x8] sm:$0xf]
    %v503 = vld [vmem:[%s5 + $0xc] sm:$0xf]
    %v504 = vld [vmem:[%s5 + $0x10] sm:$0xf]
    %v505 = vld [vmem:[%s5 + $0x14] sm:$0xf]
    %v506 = vld [vmem:[%s5 + $0x18] sm:$0xf]
    %v507 = vld [vmem:[%s5 + $0x1c] sm:$0xf]
    %v508 = vld [vmem:[%s5 + $0x20] sm:$0xf]
    %v509 = vld [vmem:[%s5 + $0x24] sm:$0xf]
    %v510 = vld [vmem:[%s5 + $0x28] sm:$0xf]
    %v511 = vld [vmem:[%s5 + $0x2c] sm:$0xf]
    %v512 = vld [vmem:[%s5 + $0x30] sm:$0xf]
    %v513 = vld [vmem:[%s5 + $0x34] sm:$0xf]
    %v514 = vld [vmem:[%s5 + $0x38] sm:$0xf]
    %v515 = vld [vmem:[%s5 + $0x3c] sm:$0xf]
    %v516 = vld [vmem:[%s6] sm:$0x1]
    %v518 = vlaneseq
    %v519 = vshrl.u32 %v518, 7
    %v520 = vsub.s32 0, %v519
    %v521 = vrot.slane %v516, %v520
    %v539 = vunpack.c.l.b16 %v500
    %v540 = vunpack.c.l.b16 %v501
    %v541 = vunpack.c.l.b16 %v502
    %v542 = vunpack.c.l.b16 %v503
    %v543 = vunpack.c.l.b16 %v504
    %v544 = vunpack.c.l.b16 %v505
    %v545 = vunpack.c.l.b16 %v506
    %v546 = vunpack.c.l.b16 %v507
    %v547 = vunpack.c.l.b16 %v508
    %v548 = vunpack.c.l.b16 %v509
    %v549 = vunpack.c.l.b16 %v510
    %v550 = vunpack.c.l.b16 %v511
    %v551 = vunpack.c.l.b16 %v512
    %v552 = vunpack.c.l.b16 %v513
    %v553 = vunpack.c.l.b16 %v514
    %v554 = vunpack.c.l.b16 %v515
    %v555 = vpack.c.b16 %v540, %v539
    %v556 = vpack.c.b16 %v542, %v541
    %v557 = vpack.c.b16 %v544, %v543
    %v558 = vpack.c.b16 %v546, %v545
    %v559 = vpack.c.b16 %v548, %v547
    %v560 = vpack.c.b16 %v550, %v549
    %v561 = vpack.c.b16 %v552, %v551
    %v562 = vpack.c.b16 %v554, %v553
    %571 = vmatprep.subr.bf16.mxu0 0
    %572 = vmatpush1.bf16.msra.mxu0 %v562
    %573 = vmatprep.subr.bf16.mxu0 0
    %574 = vmatpush1.bf16.msra.mxu0 %v561
    %575 = vmatprep.subr.bf16.mxu0 0
    %576 = vmatpush1.bf16.msra.mxu0 %v560
    %577 = vmatprep.subr.bf16.mxu0 0
    %578 = vmatpush1.bf16.msra.mxu0 %v559
    %579 = vmatprep.subr.bf16.mxu0 0
    %580 = vmatpush1.bf16.msra.mxu0 %v558
    %581 = vmatprep.subr.bf16.mxu0 0
    %582 = vmatpush1.bf16.msra.mxu0 %v557
    %583 = vmatprep.subr.bf16.mxu0 0
    %584 = vmatpush1.bf16.msra.mxu0 %v556
    %585 = vmatprep.subr.bf16.mxu0 0
    %586 = vmatpush1.bf16.msra.mxu0 %v555
    %587 = vmatprep.subr.bf16.mxu0 0
    %588 = vmatpush2.bf16.msra.mxu0 0
    %589 = vmatprep.subr.bf16.mxu0 0
    %590 = vmatpush2.bf16.msra.mxu0 0
    %591 = vmatprep.subr.bf16.mxu0 0
    %592 = vmatpush2.bf16.msra.mxu0 0
    %593 = vmatprep.subr.bf16.mxu0 0
    %594 = vmatpush2.bf16.msra.mxu0 0
    %595 = vmatprep.subr.bf16.mxu0 0
    %596 = vmatpush2.bf16.msra.mxu0 0
    %597 = vmatprep.subr.bf16.mxu0 0
    %598 = vmatpush2.bf16.msra.mxu0 0
    %599 = vmatprep.subr.bf16.mxu0 0
    %600 = vmatpush2.bf16.msra.mxu0 0
    %601 = vmatprep.subr.bf16.mxu0 0
    %602 = vmatpush2.bf16.msra.mxu0 0
    %603 = vmatprep.mubr.bf16.mxu0 0
    %604 = vmatmul.mubr.bf16.gmra.mxu0 %v499
    %v605 = vpop.f32.mrf.mxu0
    %v606 = vadd.f32 %v521, %v605
    %v607 = vpop.f32.mrf.mxu0
    %v608 = vpop.f32.mrf.mxu0
    %v609 = vpop.f32.mrf.mxu0
    %610 = vdwg.mxu0
    %v611 = vmax.f32 %v606, 0.0
    %v612 = vpack.c.bf16 %v611, %v611
    %v613 = vld [vmem:[#allocation4] sm:$0xf]
    %v614 = vld [vmem:[#allocation4 + $0x4] sm:$0xf]
    %v615 = vld [vmem:[#allocation4 + $0x8] sm:$0xf]
    %v616 = vld [vmem:[#allocation4 + $0xc] sm:$0xf]
    %v617 = vld [vmem:[#allocation4 + $0x10] sm:$0xf]
    %v618 = vld [vmem:[#allocation4 + $0x14] sm:$0xf]
    %v619 = vld [vmem:[#allocation4 + $0x18] sm:$0xf]
    %v620 = vld [vmem:[#allocation4 + $0x1c] sm:$0xf]
    %v621 = vld [vmem:[%s8] sm:$0x1]
    %v623 = vlaneseq
    %v624 = vshrl.u32 %v623, 7
    %v625 = vsub.s32 0, %v624
    %v626 = vrot.slane %v621, %v625
    %v636 = vunpack.c.l.b16 %v613
    %v637 = vunpack.c.l.b16 %v614
    %v638 = vunpack.c.l.b16 %v615
    %v639 = vunpack.c.l.b16 %v616
    %v640 = vunpack.c.l.b16 %v617
    %v641 = vunpack.c.l.b16 %v618
    %v642 = vunpack.c.l.b16 %v619
    %v643 = vunpack.c.l.b16 %v620
    %v644 = vpack.c.b16 %v637, %v636
    %v645 = vpack.c.b16 %v639, %v638
    %v646 = vpack.c.b16 %v641, %v640
    %v647 = vpack.c.b16 %v643, %v642
    %vm652 = vcmask 523264
    %v654 = vsel %vm652, %v612, 0
    %656 = vmatprep.subr.bf16.mxu0 0
    %657 = vmatpush1.bf16.msra.mxu0 0
    %658 = vmatprep.subr.bf16.mxu0 0
    %659 = vmatpush1.bf16.msra.mxu0 0
    %660 = vmatprep.subr.bf16.mxu0 0
    %661 = vmatpush1.bf16.msra.mxu0 0
    %662 = vmatprep.subr.bf16.mxu0 0
    %663 = vmatpush1.bf16.msra.mxu0 0
    %664 = vmatprep.subr.bf16.mxu0 0
    %665 = vmatpush1.bf16.msra.mxu0 %v647
    %666 = vmatprep.subr.bf16.mxu0 0
    %667 = vmatpush1.bf16.msra.mxu0 %v646
    %668 = vmatprep.subr.bf16.mxu0 0
    %669 = vmatpush1.bf16.msra.mxu0 %v645
    %670 = vmatprep.subr.bf16.mxu0 0
    %671 = vmatpush1.bf16.msra.mxu0 %v644
    %672 = vmatprep.subr.bf16.mxu0 0
    %673 = vmatpush2.bf16.msra.mxu0 0
    %674 = vmatprep.subr.bf16.mxu0 0
    %675 = vmatpush2.bf16.msra.mxu0 0
    %676 = vmatprep.subr.bf16.mxu0 0
    %677 = vmatpush2.bf16.msra.mxu0 0
    %678 = vmatprep.subr.bf16.mxu0 0
    %679 = vmatpush2.bf16.msra.mxu0 0
    %680 = vmatprep.subr.bf16.mxu0 0
    %681 = vmatpush2.bf16.msra.mxu0 0
    %682 = vmatprep.subr.bf16.mxu0 0
    %683 = vmatpush2.bf16.msra.mxu0 0
    %684 = vmatprep.subr.bf16.mxu0 0
    %685 = vmatpush2.bf16.msra.mxu0 0
    %686 = vmatprep.subr.bf16.mxu0 0
    %687 = vmatpush2.bf16.msra.mxu0 0
    %688 = vmatprep.mubr.bf16.mxu0 0
    %689 = vmatmul.mubr.bf16.gmra.mxu0 %v654
    %v690 = vpop.f32.mrf.mxu0
    %v691 = vadd.f32 %v626, %v690
    %v692 = vpop.f32.mrf.mxu0
    %v693 = vpop.f32.mrf.mxu0
    %v694 = vpop.f32.mrf.mxu0
    %695 = vdwg.mxu0
    %v696 = vpack.c.bf16 %v691, %v691
    %697 = vst [vmem:[%s9] sm:$0xf] %v696
    // Predicated region
    $region46: #{torch_nn_forward.1} parent=1 // pred_check
      _
    $region47: #{torch_nn_forward.1} parent=1 // pred_check_branch
      %699 = sbr.rel (0) target = $region49
    $region48: #{torch_nn_forward.1} parent=1 // pred_region
      _
    $region49: #{torch_nn_forward.1} parent=1 // pred_fallthru
      _
    // Predicated region
    $region50: #{torch_nn_forward.1} parent=1 // pred_check
      _
    $region51: #{torch_nn_forward.1} parent=1 // pred_check_branch
      %701 = sbr.rel (0) target = $region53
    $region52: #{torch_nn_forward.1} parent=1 // pred_region
      _
    $region53: #{torch_nn_forward.1} parent=1 // pred_fallthru
      _
    %702 = vsyncpa [#allocation3], 1
    %703 = vsyncpa [#allocation5], 1

</llo_original>
